<compile_context>
chip_gen: v7x
topology: tpu7x:2x2x1
jax: 0.10.0
libtpu: 0.0.40
codegen_flags: <defaults>
</compile_context>

<pallas_src>
import functools

import jax
import jax.numpy as jnp
from jax import lax
from jax.experimental import pallas as pl
from jax.experimental.pallas import tpu as pltpu


def _round_up(x: int, m: int) -> int:
    return (x + m - 1) // m * m


def _fused_mlp_kernel(*refs, n_layers: int, n_rows: int, out_features: int,
                      eps: float, matmul_dtype):
    """Fused (Linear -> BN(train stats) -> ReLU) x L, last layer without ReLU.

    refs layout: (x_ref, [w_ref, gamma_ref, beta_ref] * n_layers, o_ref).
    Every ref is a single full-array VMEM block, so the batch reduction for the
    batch-norm statistics sees the whole batch.
    """
    x_ref = refs[0]
    o_ref = refs[-1]
    p_refs = refs[1:-1]

    h = x_ref[...].astype(jnp.float32)                        # [N, F_in] (unpadded)
    inv_n = 1.0 / float(n_rows)

    for i in range(n_layers):
        w = p_refs[3 * i][...]                                # [Fi(_pad), Fo_pad]
        gamma = p_refs[3 * i + 1][...].astype(jnp.float32)    # [1, Fo_pad]
        beta = p_refs[3 * i + 2][...].astype(jnp.float32)     # [1, Fo_pad]

        # Linear on the MXU (f32 accumulation). Linear bias is omitted: it is
        # cancelled exactly by the training-mode BN mean subtraction below.
        h = jnp.dot(h.astype(matmul_dtype), w.astype(matmul_dtype),
                    preferred_element_type=jnp.float32)        # [N, Fo_pad]

        # BatchNorm1d (training-mode) with centered two-pass variance.
        # `d` is reused for both the variance and the affine output, so the
        # full-width op count equals the fused (h*scale + shift) form while
        # avoiding E[x^2]-E[x]^2 cancellation.
        mean = jnp.sum(h, axis=0, keepdims=True) * inv_n
        d = h - mean
        var = jnp.sum(d * d, axis=0, keepdims=True) * inv_n    # biased variance
        scale = lax.rsqrt(var + eps) * gamma
        h = d * scale + beta

        if i < n_layers - 1:                                   # last ReLU stripped
            h = jnp.maximum(h, 0.0)

    # Store only the real output columns; padded columns are identically zero.
    o_ref[...] = h[:, :out_features].astype(o_ref.dtype)


def pad_params(params):
    """One-time (hoisted) zero-padding of parameters to lane-dense 128-wide blocks.

    params: list of (w [f_in, f_out], b [1, f_out], gamma [1, f_out], beta [1, f_out]).
    w is stored transposed vs. PyTorch (x @ w == x @ weight.T). b is accepted for
    interface parity but dropped (cancelled by training-mode BatchNorm).
    Returns (padded_params, out_features) where padded_params is a list of
    (w_pad, gamma_pad, beta_pad). Zero padding is exact: padded columns stay 0
    through Linear / BN / ReLU.
    """
    padded = []
    prev_pad = None
    for i, (w, _b, gamma, beta) in enumerate(params):
        fi, fo = w.shape
        fo_pad = _round_up(fo, 128)
        in_dim = fi if i == 0 else prev_pad          # layer 0 consumes unpadded x
        w_pad = jnp.zeros((in_dim, fo_pad), w.dtype).at[:fi, :fo].set(w)
        gamma_pad = jnp.zeros((1, fo_pad), gamma.dtype).at[:, :fo].set(gamma)
        beta_pad = jnp.zeros((1, fo_pad), beta.dtype).at[:, :fo].set(beta)
        padded.append((w_pad, gamma_pad, beta_pad))
        prev_pad = fo_pad
    out_features = params[-1][0].shape[1]
    return padded, out_features


def mlp_forward(x, padded_params, out_features, *, eps: float = 1e-5,
                matmul_dtype=jnp.float32):
    """Full MLP forward in one fused, gridless pallas_call.

    x: [n, f_in] (unpadded). padded_params: output of pad_params (built once).
    No per-call host-side padding or slicing ops.
    """
    n, f_in = x.shape
    n_layers = len(padded_params)

    flat_inputs = [x]
    in_specs = [pl.BlockSpec((n, f_in), lambda: (0, 0))]      # full-extent block
    for (w_pad, gamma_pad, beta_pad) in padded_params:
        flat_inputs += [w_pad, gamma_pad, beta_pad]
        in_specs += [
            pl.BlockSpec(w_pad.shape, lambda: (0, 0)),
            pl.BlockSpec(gamma_pad.shape, lambda: (0, 0)),
            pl.BlockSpec(beta_pad.shape, lambda: (0, 0)),
        ]

    # VMEM budget from actual buffer bytes. Gridless call => no pipelined
    # prefetch, so no 2x double-buffer factor. Cap keeps it v7x-safe (64 MiB).
    total_bytes = sum(int(a.size) * a.dtype.itemsize for a in flat_inputs)
    total_bytes += n * out_features * jnp.dtype(x.dtype).itemsize
    vmem_limit = int(min(total_bytes + (4 << 20), 32 << 20))

    kernel = functools.partial(
        _fused_mlp_kernel,
        n_layers=n_layers, n_rows=n, out_features=out_features,
        eps=eps, matmul_dtype=matmul_dtype)

    return pl.pallas_call(
        kernel,
        out_shape=jax.ShapeDtypeStruct((n, out_features), x.dtype),
        in_specs=in_specs,
        out_specs=pl.BlockSpec((n, out_features), lambda: (0, 0)),
        compiler_params=pltpu.CompilerParams(vmem_limit_bytes=vmem_limit),
    )(*flat_inputs)


def init_mlp_params(key, sizes):
    """Deterministic parameter init matching the module's __init__ shapes."""
    params = []
    for s in range(len(sizes) - 1):
        f_in, f_out = sizes[s], sizes[s + 1]
        key, kw, kb = jax.random.split(key, 3)
        bound = 1.0 / (f_in ** 0.5)
        w = jax.random.uniform(kw, (f_in, f_out), jnp.float32, -bound, bound)
        b = jax.random.uniform(kb, (1, f_out), jnp.float32, -bound, bound)
        gamma = jnp.ones((1, f_out), jnp.float32)   # BatchNorm1d weight
        beta = jnp.zeros((1, f_out), jnp.float32)   # BatchNorm1d bias
        params.append((w, b, gamma, beta))
    return params


def mlp_reference(x, params, eps=1e-5):
    """Pure-JAX reference with the Linear bias included (BN cancels it)."""
    n_layers = len(params)
    h = x
    for i, (w, b, gamma, beta) in enumerate(params):
        h = h @ w + b
        mean = jnp.mean(h, axis=0, keepdims=True)
        var = jnp.mean((h - mean) ** 2, axis=0, keepdims=True)   # biased variance
        h = (h - mean) / jnp.sqrt(var + eps) * gamma + beta
        if i < n_layers - 1:
            h = jnp.maximum(h, 0.0)
    return h


if __name__ == "__main__":
    # Small shapes consistent with the module: sizes=[16, 32, 8], batch=8.
    sizes = [16, 32, 8]
    batch = 8

    key = jax.random.PRNGKey(0)
    key, kx = jax.random.split(key)
    x = jax.random.normal(kx, (batch, sizes[0]), jnp.float32)

    params = init_mlp_params(key, sizes)
    # One-time padding, hoisted out of the per-call forward path.
    padded_params, out_features = pad_params(params)
    padded_params = jax.block_until_ready(padded_params)

    fwd = jax.jit(functools.partial(mlp_forward, out_features=out_features))
    out = fwd(x, padded_params)
    jax.block_until_ready(out)
    assert out.shape == (batch, sizes[-1]), out.shape

    ref = mlp_reference(x, params)
    max_err = float(jnp.max(jnp.abs(out - ref)))
    assert max_err < 2e-3, max_err

    print("KERNEL_OK")
</pallas_src>

<mosaic_0001>
module attributes {stable_mosaic.version = 11 : i64} {
  func.func @_fused_mlp_kernel(%arg0: memref<8x16xf32, #tpu.memory_space<vmem>>, %arg1: memref<16x128xf32, #tpu.memory_space<vmem>>, %arg2: memref<1x128xf32, #tpu.memory_space<vmem>>, %arg3: memref<1x128xf32, #tpu.memory_space<vmem>>, %arg4: memref<128x128xf32, #tpu.memory_space<vmem>>, %arg5: memref<1x128xf32, #tpu.memory_space<vmem>>, %arg6: memref<1x128xf32, #tpu.memory_space<vmem>>, %arg7: memref<8x8xf32, #tpu.memory_space<vmem>>) attributes {dimension_semantics = [], scalar_prefetch = 0 : i64, scratch_operands = 0 : i64, tpu.core_type = #tpu.core_type<tc>} {
    %c0 = arith.constant 0 : index
    %c0_0 = arith.constant 0 : index
    %0 = vector.load %arg0[%c0, %c0_0] : memref<8x16xf32, #tpu.memory_space<vmem>>, vector<8x16xf32>
    %c0_1 = arith.constant 0 : index
    %c0_2 = arith.constant 0 : index
    %1 = vector.load %arg1[%c0_1, %c0_2] : memref<16x128xf32, #tpu.memory_space<vmem>>, vector<16x128xf32>
    %c0_3 = arith.constant 0 : index
    %c0_4 = arith.constant 0 : index
    %2 = vector.load %arg2[%c0_3, %c0_4] : memref<1x128xf32, #tpu.memory_space<vmem>>, vector<1x128xf32>
    %c0_5 = arith.constant 0 : index
    %c0_6 = arith.constant 0 : index
    %3 = vector.load %arg3[%c0_5, %c0_6] : memref<1x128xf32, #tpu.memory_space<vmem>>, vector<1x128xf32>
    %cst = arith.constant dense<0.000000e+00> : vector<8x128xf32>
    %4 = tpu.matmul %0, %1, %cst {dimension_numbers = #tpu.dot_dimension_numbers<[1], [0], [0], [1], [0, 0, 1, 1], [], []>} : vector<8x16xf32>, vector<16x128xf32>, vector<8x128xf32> -> vector<8x128xf32>
    %cst_7 = arith.constant dense<0.000000e+00> : vector<128xf32>
    %5 = vector.multi_reduction <add>, %4, %cst_7 [0] : vector<8x128xf32> to vector<128xf32>
    %6 = vector.shape_cast %5 : vector<128xf32> to vector<1x128xf32>
    %cst_8 = arith.constant 1.250000e-01 : f32
    %7 = vector.broadcast %cst_8 : f32 to vector<1x128xf32>
    %8 = arith.mulf %6, %7 : vector<1x128xf32>
    %9 = vector.broadcast %8 : vector<1x128xf32> to vector<8x128xf32>
    %10 = arith.subf %4, %9 : vector<8x128xf32>
    %11 = arith.mulf %10, %10 : vector<8x128xf32>
    %cst_9 = arith.constant dense<0.000000e+00> : vector<128xf32>
    %12 = vector.multi_reduction <add>, %11, %cst_9 [0] : vector<8x128xf32> to vector<128xf32>
    %13 = vector.shape_cast %12 : vector<128xf32> to vector<1x128xf32>
    %cst_10 = arith.constant 1.250000e-01 : f32
    %14 = vector.broadcast %cst_10 : f32 to vector<1x128xf32>
    %15 = arith.mulf %13, %14 : vector<1x128xf32>
    %cst_11 = arith.constant 9.99999974E-6 : f32
    %16 = vector.broadcast %cst_11 : f32 to vector<1x128xf32>
    %17 = arith.addf %15, %16 : vector<1x128xf32>
    %18 = math.rsqrt %17 : vector<1x128xf32>
    %19 = arith.mulf %18, %2 : vector<1x128xf32>
    %20 = vector.broadcast %19 : vector<1x128xf32> to vector<8x128xf32>
    %21 = arith.mulf %10, %20 : vector<8x128xf32>
    %22 = vector.broadcast %3 : vector<1x128xf32> to vector<8x128xf32>
    %23 = arith.addf %21, %22 : vector<8x128xf32>
    %cst_12 = arith.constant 0.000000e+00 : f32
    %24 = vector.broadcast %cst_12 : f32 to vector<8x128xf32>
    %25 = arith.maximumf %23, %24 : vector<8x128xf32>
    %c0_13 = arith.constant 0 : index
    %c0_14 = arith.constant 0 : index
    %26 = vector.load %arg4[%c0_13, %c0_14] : memref<128x128xf32, #tpu.memory_space<vmem>>, vector<128x128xf32>
    %c0_15 = arith.constant 0 : index
    %c0_16 = arith.constant 0 : index
    %27 = vector.load %arg5[%c0_15, %c0_16] : memref<1x128xf32, #tpu.memory_space<vmem>>, vector<1x128xf32>
    %c0_17 = arith.constant 0 : index
    %c0_18 = arith.constant 0 : index
    %28 = vector.load %arg6[%c0_17, %c0_18] : memref<1x128xf32, #tpu.memory_space<vmem>>, vector<1x128xf32>
    %cst_19 = arith.constant dense<0.000000e+00> : vector<8x128xf32>
    %29 = tpu.matmul %25, %26, %cst_19 {dimension_numbers = #tpu.dot_dimension_numbers<[1], [0], [0], [1], [0, 0, 1, 1], [], []>} : vector<8x128xf32>, vector<128x128xf32>, vector<8x128xf32> -> vector<8x128xf32>
    %cst_20 = arith.constant dense<0.000000e+00> : vector<128xf32>
    %30 = vector.multi_reduction <add>, %29, %cst_20 [0] : vector<8x128xf32> to vector<128xf32>
    %31 = vector.shape_cast %30 : vector<128xf32> to vector<1x128xf32>
    %cst_21 = arith.constant 1.250000e-01 : f32
    %32 = vector.broadcast %cst_21 : f32 to vector<1x128xf32>
    %33 = arith.mulf %31, %32 : vector<1x128xf32>
    %34 = vector.broadcast %33 : vector<1x128xf32> to vector<8x128xf32>
    %35 = arith.subf %29, %34 : vector<8x128xf32>
    %36 = arith.mulf %35, %35 : vector<8x128xf32>
    %cst_22 = arith.constant dense<0.000000e+00> : vector<128xf32>
    %37 = vector.multi_reduction <add>, %36, %cst_22 [0] : vector<8x128xf32> to vector<128xf32>
    %38 = vector.shape_cast %37 : vector<128xf32> to vector<1x128xf32>
    %cst_23 = arith.constant 1.250000e-01 : f32
    %39 = vector.broadcast %cst_23 : f32 to vector<1x128xf32>
    %40 = arith.mulf %38, %39 : vector<1x128xf32>
    %cst_24 = arith.constant 9.99999974E-6 : f32
    %41 = vector.broadcast %cst_24 : f32 to vector<1x128xf32>
    %42 = arith.addf %40, %41 : vector<1x128xf32>
    %43 = math.rsqrt %42 : vector<1x128xf32>
    %44 = arith.mulf %43, %27 : vector<1x128xf32>
    %45 = vector.broadcast %44 : vector<1x128xf32> to vector<8x128xf32>
    %46 = arith.mulf %35, %45 : vector<8x128xf32>
    %47 = vector.broadcast %28 : vector<1x128xf32> to vector<8x128xf32>
    %48 = arith.addf %46, %47 : vector<8x128xf32>
    %49 = vector.extract_strided_slice %48 {offsets = [0, 0], sizes = [8, 8], strides = [1, 1]} : vector<8x128xf32> to vector<8x8xf32>
    %c0_25 = arith.constant 0 : index
    %c0_26 = arith.constant 0 : index
    %50 = vector.load %arg7[%c0_25, %c0_26] : memref<8x8xf32, #tpu.memory_space<vmem>>, vector<8x8xf32>
    tpu.vector_store %arg7[%c0_25, %c0_26], %49 {strides = array<i32>} : memref<8x8xf32, #tpu.memory_space<vmem>>, vector<8x8xf32>,
    return
  }
}

</mosaic_0001>

<llo_original>
// kernel: mlp_forward.1
$region0: #{mlp_forward.1}
  #allocation0 [shape = 'u32[]', space=smem, size = 0x4, offset = 0x4, fixed_abs, tag = 'smem constant byte address 0x4 - core index']
  #allocation1 [shape = 'u32[144,128]{1,0:T(1,128)}', space=vmem, size = 0x12000, scoped, tag = 'internal scratch']
  %s0 = inlined_call_operand.hbm [shape: f32[8,16], index: 0, kind: input, shape index: {}]
  %s1 = inlined_call_operand.hbm [shape: f32[16,128], index: 1, kind: input, shape index: {}]
  %s2 = inlined_call_operand.vmem [shape: f32[1,128], index: 2, kind: input, shape index: {}]
  %s3 = inlined_call_operand.vmem [shape: f32[1,128], index: 3, kind: input, shape index: {}]
  %s4 = inlined_call_operand.hbm [shape: f32[128,128], index: 4, kind: input, shape index: {}]
  %s5 = inlined_call_operand.vmem [shape: f32[1,128], index: 5, kind: input, shape index: {}]
  %s6 = inlined_call_operand.vmem [shape: f32[1,128], index: 6, kind: input, shape index: {}]
  %s7 = inlined_call_operand.hbm [shape: f32[8,8], index: 7, kind: output, shape index: {}]
  %s8 = sld [smem:[#allocation0]]
  $region50: #{mlp_forward.1} parent=0
    _
  %s10 = ssub.s32 1, %s8
  %s11 = scalar_select 0, %s10, %s8
  $region1: #{mlp_forward.1} parent=0
    #allocation2 [shape = 'u8[4096]{0}', space=vmem, size = 0x1000, scoped, tag = 'input window, operand 0, single buffered']
    #allocation3 [shape = 's32[1]{0}', space=sflag, size = 0x4, scoped, tag = 'scoped memory for mlp_forward.1']
    #allocation4 [shape = 's32[1]{0}', space=sflag, size = 0x4, scoped, tag = 'scoped memory for mlp_forward.1']
    #allocation5 [shape = 'u8[8192]{0}', space=vmem, size = 0x2000, scoped, tag = 'input window, operand 1, single buffered']
    #allocation6 [shape = 's32[1]{0}', space=sflag, size = 0x4, scoped, tag = 'scoped memory for mlp_forward.1']
    #allocation7 [shape = 'u8[65536]{0}', space=vmem, size = 0x10000, scoped, tag = 'input window, operand 4, single buffered']
    #allocation8 [shape = 'u8[4096]{0}', space=vmem, size = 0x1000, scoped, tag = 'output window, operand 0, single buffered']
    %12 = vsyncpa [#allocation3], 0
    %13 = vsyncpa [#allocation6], 0
    %14 = vsyncpa [#allocation4], 0
    // Predicated region
    $region2: #{mlp_forward.1} parent=1 // pred_check
      _
    $region3: #{mlp_forward.1} parent=1 // pred_check_branch
      %16 = sbr.rel (0) target = $region5
    $region4: #{mlp_forward.1} parent=1 // pred_region
      %s18 = ssub.s32 128, 128
      %19 = vsyncadd [#allocation3], %s18
      %s21 = sshll.u32 [#allocation2], 4
      %s22 = int_to_ptr.vmem [resolvable:$true] %s21
      %24 = dma.hbm_to_vmem [thread:$0]  %s0, 128, %s22, [#allocation3]
    $region5: #{mlp_forward.1} parent=1 // pred_fallthru
      _
    // Predicated region
    $region6: #{mlp_forward.1} parent=1 // pred_check
      _
    $region7: #{mlp_forward.1} parent=1 // pred_check_branch
      %26 = sbr.rel (0) target = $region9
    $region8: #{mlp_forward.1} parent=1 // pred_region
      %s28 = ssub.s32 256, 256
      %29 = vsyncadd [#allocation6], %s28
      %s30 = sshll.u32 [#allocation5], 4
      %s31 = int_to_ptr.vmem [resolvable:$true] %s30
      %36 = dma.hbm_to_vmem [thread:$0]  %s1, 256, %s31, [#allocation6], 128, 128, 8
    $region9: #{mlp_forward.1} parent=1 // pred_fallthru
      _
    // Predicated region
    $region10: #{mlp_forward.1} parent=1 // pred_check
      _
    $region11: #{mlp_forward.1} parent=1 // pred_check_branch
      %38 = sbr.rel (0) target = $region13
    $region12: #{mlp_forward.1} parent=1 // pred_region
      _
    $region13: #{mlp_forward.1} parent=1 // pred_fallthru
      _
    // Predicated region
    $region14: #{mlp_forward.1} parent=1 // pred_check
      _
    $region15: #{mlp_forward.1} parent=1 // pred_check_branch
      %40 = sbr.rel (0) target = $region17
    $region16: #{mlp_forward.1} parent=1 // pred_region
      _
    $region17: #{mlp_forward.1} parent=1 // pred_fallthru
      _
    // Predicated region
    $region18: #{mlp_forward.1} parent=1 // pred_check
      _
    $region19: #{mlp_forward.1} parent=1 // pred_check_branch
      %42 = sbr.rel (0) target = $region21
    $region20: #{mlp_forward.1} parent=1 // pred_region
      %s44 = ssub.s32 2048, 2048
      %45 = vsyncadd [#allocation6], %s44
      %s46 = sshll.u32 [#allocation7], 4
      %s47 = int_to_ptr.vmem [resolvable:$true] %s46
      %52 = dma.hbm_to_vmem [thread:$0]  %s4, 2048, %s47, [#allocation6], 128, 128, 8
    $region21: #{mlp_forward.1} parent=1 // pred_fallthru
      _
    // Predicated region
    $region22: #{mlp_forward.1} parent=1 // pred_check
      _
    $region23: #{mlp_forward.1} parent=1 // pred_check_branch
      %54 = sbr.rel (0) target = $region25
    $region24: #{mlp_forward.1} parent=1 // pred_region
      _
    $region25: #{mlp_forward.1} parent=1 // pred_fallthru
      _
    // Predicated region
    $region26: #{mlp_forward.1} parent=1 // pred_check
      _
    $region27: #{mlp_forward.1} parent=1 // pred_check_branch
      %56 = sbr.rel (0) target = $region29
    $region28: #{mlp_forward.1} parent=1 // pred_region
      _
    $region29: #{mlp_forward.1} parent=1 // pred_fallthru
      _
    // Predicated region
    $region30: #{mlp_forward.1} parent=1 // pred_check
      _
    $region31: #{mlp_forward.1} parent=1 // pred_check_branch
      %58 = sbr.rel (0) target = $region33
    $region32: #{mlp_forward.1} parent=1 // pred_region
      %59 = dma.done [#allocation3], 128
    $region33: #{mlp_forward.1} parent=1 // pred_fallthru
      _
    // Predicated region
    $region34: #{mlp_forward.1} parent=1 // pred_check
      _
    $region35: #{mlp_forward.1} parent=1 // pred_check_branch
      %61 = sbr.rel (0) target = $region37
    $region36: #{mlp_forward.1} parent=1 // pred_region
      %62 = dma.done [#allocation6], 256
    $region37: #{mlp_forward.1} parent=1 // pred_fallthru
      _
    // Predicated region
    $region38: #{mlp_forward.1} parent=1 // pred_check
      _
    $region39: #{mlp_forward.1} parent=1 // pred_check_branch
      %64 = sbr.rel (0) target = $region41
    $region40: #{mlp_forward.1} parent=1 // pred_region
      %65 = dma.done [#allocation6], 2048
    $region41: #{mlp_forward.1} parent=1 // pred_fallthru
      _
    %v66 = vld [vmem:[#allocation2] sm:$0xff]
    %v67 = vld [vmem:[#allocation5] sm:$0xff]
    %v68 = vld [vmem:[#allocation5 + $0x8] sm:$0xff]
    %v69 = vld [vmem:[%s2] sm:$0x1]
    %v70 = vld [vmem:[%s3] sm:$0x1]
    %vm71 = vcmask 130048
    %v73 = vsel %vm71, %v66, 0
    %75 = vmatprep.subr.mxu0 0.0
    %76 = vmatpush1.msra.mxu0 %v67
    %77 = vmatprep.subr.mxu0 0.0
    %78 = vmatpush1.msra.mxu0 %v68
    %79 = vmatprep.subr.mxu0 0.0
    %80 = vmatpush1.msra.mxu0 0.0
    %81 = vmatprep.subr.mxu0 0.0
    %82 = vmatpush1.msra.mxu0 0.0
    %83 = vmatprep.subr.mxu0 0.0
    %84 = vmatpush1.msra.mxu0 0.0
    %85 = vmatprep.subr.mxu0 0.0
    %86 = vmatpush1.msra.mxu0 0.0
    %87 = vmatprep.subr.mxu0 0.0
    %88 = vmatpush1.msra.mxu0 0.0
    %89 = vmatprep.subr.mxu0 0.0
    %90 = vmatpush1.msra.mxu0 0.0
    %91 = vmatprep.subr.mxu0 0.0
    %92 = vmatpush1.msra.mxu0 0.0
    %93 = vmatprep.subr.mxu0 0.0
    %94 = vmatpush1.msra.mxu0 0.0
    %95 = vmatprep.subr.mxu0 0.0
    %96 = vmatpush1.msra.mxu0 0.0
    %97 = vmatprep.subr.mxu0 0.0
    %98 = vmatpush1.msra.mxu0 0.0
    %99 = vmatprep.subr.mxu0 0.0
    %100 = vmatpush1.msra.mxu0 0.0
    %101 = vmatprep.subr.mxu0 0.0
    %102 = vmatpush1.msra.mxu0 0.0
    %103 = vmatprep.subr.mxu0 0.0
    %104 = vmatpush1.msra.mxu0 0.0
    %105 = vmatprep.subr.mxu0 0.0
    %106 = vmatpush1.msra.mxu0 0.0
    %107 = vmatprep.subr.mxu0 0.0
    %108 = vmatpush1.msra.mxu0 0.0
    %109 = vmatprep.subr.mxu0 0.0
    %110 = vmatpush1.msra.mxu0 0.0
    %111 = vmatprep.subr.mxu0 0.0
    %112 = vmatpush1.msra.mxu0 0.0
    %113 = vmatprep.subr.mxu0 0.0
    %114 = vmatpush1.msra.mxu0 0.0
    %115 = vmatprep.subr.mxu0 0.0
    %116 = vmatpush1.msra.mxu0 0.0
    %117 = vmatprep.subr.mxu0 0.0
    %118 = vmatpush1.msra.mxu0 0.0
    %119 = vmatprep.subr.mxu0 0.0
    %120 = vmatpush1.msra.mxu0 0.0
    %121 = vmatprep.subr.mxu0 0.0
    %122 = vmatpush1.msra.mxu0 0.0
    %123 = vmatprep.subr.mxu0 0.0
    %124 = vmatpush1.msra.mxu0 0.0
    %125 = vmatprep.subr.mxu0 0.0
    %126 = vmatpush1.msra.mxu0 0.0
    %127 = vmatprep.subr.mxu0 0.0
    %128 = vmatpush1.msra.mxu0 0.0
    %129 = vmatprep.subr.mxu0 0.0
    %130 = vmatpush1.msra.mxu0 0.0
    %131 = vmatprep.subr.mxu0 0.0
    %132 = vmatpush1.msra.mxu0 0.0
    %133 = vmatprep.subr.mxu0 0.0
    %134 = vmatpush1.msra.mxu0 0.0
    %135 = vmatprep.subr.mxu0 0.0
    %136 = vmatpush1.msra.mxu0 0.0
    %137 = vmatprep.subr.mxu0 0.0
    %138 = vmatpush1.msra.mxu0 0.0
    %139 = vmatprep.mubr.f32.mxu0 0.0
    %140 = vmatmul.mubr.f32.gmra.mrb[0].mxu0 %v73
    %v141 = vpop.f32.mrb[0].mxu0
    %v142 = vadd.f32 0.0, %v141
    %v143 = vpop.f32.mrb[0].mxu0
    %144 = vdwg.mxu0
    %v145 = vrot.slane %v142, 4
    %v146 = vadd.f32 %v142, %v145
    %v147 = vrot.slane %v146, 2
    %v148 = vadd.f32 %v146, %v147
    %v149 = vrot.slane %v148, 1
    %v150 = vadd.f32 %v148, %v149
    %v151 = vmul.f32 %v150, 0.125
    %v152 = vsub.f32 %v142, %v151
    %v153 = vmul.f32 %v152, %v152
    %v154 = vrot.slane %v153, 4
    %v155 = vadd.f32 %v153, %v154
    %v156 = vrot.slane %v155, 2
    %v157 = vadd.f32 %v155, %v156
    %v158 = vrot.slane %v157, 1
    %v159 = vadd.f32 %v157, %v158
    %v160 = vmul.f32 %v159, 0.125
    %v161 = vadd.f32 %v160, 1e-05
    %v162 = vrsqrt.pop %v161
    %v163 = vmul.f32 %v162, %v69
    %v164 = vlaneseq
    %v165 = vshrl.u32 %v164, 7
    %v166 = vsub.s32 0, %v165
    %v167 = vrot.slane %v163, %v166
    %v168 = vmul.f32 %v152, %v167
    %v170 = vlaneseq
    %v171 = vshrl.u32 %v170, 7
    %v172 = vsub.s32 0, %v171
    %v173 = vrot.slane %v70, %v172
    %v175 = vadd.f32 %v168, %v173
    %v176 = vmax.f32 %v175, 0.0
    %v177 = vld [vmem:[#allocation7] sm:$0xff]
    %v178 = vld [vmem:[#allocation7 + $0x8] sm:$0xff]
    %v179 = vld [vmem:[#allocation7 + $0x10] sm:$0xff]
    %v180 = vld [vmem:[#allocation7 + $0x18] sm:$0xff]
    %v181 = vld [vmem:[#allocation7 + $0x20] sm:$0xff]
    %v182 = vld [vmem:[#allocation7 + $0x28] sm:$0xff]
    %v183 = vld [vmem:[#allocation7 + $0x30] sm:$0xff]
    %v184 = vld [vmem:[#allocation7 + $0x38] sm:$0xff]
    %v185 = vld [vmem:[#allocation7 + $0x40] sm:$0xff]
    %v186 = vld [vmem:[#allocation7 + $0x48] sm:$0xff]
    %v187 = vld [vmem:[#allocation7 + $0x50] sm:$0xff]
    %v188 = vld [vmem:[#allocation7 + $0x58] sm:$0xff]
    %v189 = vld [vmem:[#allocation7 + $0x60] sm:$0xff]
    %v190 = vld [vmem:[#allocation7 + $0x68] sm:$0xff]
    %v191 = vld [vmem:[#allocation7 + $0x70] sm:$0xff]
    %v192 = vld [vmem:[#allocation7 + $0x78] sm:$0xff]
    %v193 = vld [vmem:[%s5] sm:$0x1]
    %v194 = vld [vmem:[%s6] sm:$0x1]
    %195 = vmatprep.subr.mxu0 0.0
    %196 = vmatpush1.msra.mxu0 %v177
    %197 = vmatprep.subr.mxu0 0.0
    %198 = vmatpush1.msra.mxu0 %v178
    %199 = vmatprep.subr.mxu0 0.0
    %200 = vmatpush1.msra.mxu0 %v179
    %201 = vmatprep.subr.mxu0 0.0
    %202 = vmatpush1.msra.mxu0 %v180
    %203 = vmatprep.subr.mxu0 0.0
    %204 = vmatpush1.msra.mxu0 %v181
    %205 = vmatprep.subr.mxu0 0.0
    %206 = vmatpush1.msra.mxu0 %v182
    %207 = vmatprep.subr.mxu0 0.0
    %208 = vmatpush1.msra.mxu0 %v183
    %209 = vmatprep.subr.mxu0 0.0
    %210 = vmatpush1.msra.mxu0 %v184
    %211 = vmatprep.subr.mxu0 0.0
    %212 = vmatpush1.msra.mxu0 %v185
    %213 = vmatprep.subr.mxu0 0.0
    %214 = vmatpush1.msra.mxu0 %v186
    %215 = vmatprep.subr.mxu0 0.0
    %216 = vmatpush1.msra.mxu0 %v187
    %217 = vmatprep.subr.mxu0 0.0
    %218 = vmatpush1.msra.mxu0 %v188
    %219 = vmatprep.subr.mxu0 0.0
    %220 = vmatpush1.msra.mxu0 %v189
    %221 = vmatprep.subr.mxu0 0.0
    %222 = vmatpush1.msra.mxu0 %v190
    %223 = vmatprep.subr.mxu0 0.0
    %224 = vmatpush1.msra.mxu0 %v191
    %225 = vmatprep.subr.mxu0 0.0
    %226 = vmatpush1.msra.mxu0 %v192
    %227 = vmatprep.subr.mxu0 0.0
    %228 = vmatpush1.msra.mxu0 0.0
    %229 = vmatprep.subr.mxu0 0.0
    %230 = vmatpush1.msra.mxu0 0.0
    %231 = vmatprep.subr.mxu0 0.0
    %232 = vmatpush1.msra.mxu0 0.0
    %233 = vmatprep.subr.mxu0 0.0
    %234 = vmatpush1.msra.mxu0 0.0
    %235 = vmatprep.subr.mxu0 0.0
    %236 = vmatpush1.msra.mxu0 0.0
    %237 = vmatprep.subr.mxu0 0.0
    %238 = vmatpush1.msra.mxu0 0.0
    %239 = vmatprep.subr.mxu0 0.0
    %240 = vmatpush1.msra.mxu0 0.0
    %241 = vmatprep.subr.mxu0 0.0
    %242 = vmatpush1.msra.mxu0 0.0
    %243 = vmatprep.subr.mxu0 0.0
    %244 = vmatpush1.msra.mxu0 0.0
    %245 = vmatprep.subr.mxu0 0.0
    %246 = vmatpush1.msra.mxu0 0.0
    %247 = vmatprep.subr.mxu0 0.0
    %248 = vmatpush1.msra.mxu0 0.0
    %249 = vmatprep.subr.mxu0 0.0
    %250 = vmatpush1.msra.mxu0 0.0
    %251 = vmatprep.subr.mxu0 0.0
    %252 = vmatpush1.msra.mxu0 0.0
    %253 = vmatprep.subr.mxu0 0.0
    %254 = vmatpush1.msra.mxu0 0.0
    %255 = vmatprep.subr.mxu0 0.0
    %256 = vmatpush1.msra.mxu0 0.0
    %257 = vmatprep.subr.mxu0 0.0
    %258 = vmatpush1.msra.mxu0 0.0
    %259 = vmatprep.mubr.f32.mxu0 0.0
    %260 = vmatmul.mubr.f32.gmra.mrb[0].mxu0 %v176
    %v261 = vpop.f32.mrb[0].mxu0
    %v262 = vadd.f32 0.0, %v261
    %v263 = vpop.f32.mrb[0].mxu0
    %264 = vdwg.mxu0
    %v265 = vrot.slane %v262, 4
    %v266 = vadd.f32 %v262, %v265
    %v267 = vrot.slane %v266, 2
    %v268 = vadd.f32 %v266, %v267
    %v269 = vrot.slane %v268, 1
    %v270 = vadd.f32 %v268, %v269
    %v271 = vmul.f32 %v270, 0.125
    %v272 = vsub.f32 %v262, %v271
    %v273 = vmul.f32 %v272, %v272
    %v274 = vrot.slane %v273, 4
    %v275 = vadd.f32 %v273, %v274
    %v276 = vrot.slane %v275, 2
    %v277 = vadd.f32 %v275, %v276
    %v278 = vrot.slane %v277, 1
    %v279 = vadd.f32 %v277, %v278
    %v280 = vmul.f32 %v279, 0.125
    %v281 = vadd.f32 %v280, 1e-05
    %v282 = vrsqrt.pop %v281
    %v283 = vmul.f32 %v282, %v193
    %v284 = vlaneseq
    %v285 = vshrl.u32 %v284, 7
    %v286 = vsub.s32 0, %v285
    %v287 = vrot.slane %v283, %v286
    %v288 = vmul.f32 %v272, %v287
    %v290 = vlaneseq
    %v291 = vshrl.u32 %v290, 7
    %v292 = vsub.s32 0, %v291
    %v293 = vrot.slane %v194, %v292
    %v295 = vadd.f32 %v288, %v293
    %vm296 = vcmask 64512
    %297 = vst.msk [vmem:[#allocation8] sm:$0xff] %vm296, %v295
    // Predicated region
    $region42: #{mlp_forward.1} parent=1 // pred_check
      _
    $region43: #{mlp_forward.1} parent=1 // pred_check_branch
      %299 = sbr.rel (0) target = $region45
    $region44: #{mlp_forward.1} parent=1 // pred_region
      %s301 = ssub.s32 128, 128
      %302 = vsyncadd [#allocation4], %s301
      %s304 = sshll.u32 [#allocation8], 4
      %s305 = int_to_ptr.vmem [resolvable:$true] %s304
      %307 = dma.vmem_to_hbm [thread:$0]  %s305, 128, %s7, [#allocation4]
    $region45: #{mlp_forward.1} parent=1 // pred_fallthru
      _
    // Predicated region
    $region46: #{mlp_forward.1} parent=1 // pred_check
      _
    $region47: #{mlp_forward.1} parent=1 // pred_check_branch
      %309 = sbr.rel (0) target = $region49
    $region48: #{mlp_forward.1} parent=1 // pred_region
      %310 = dma.done [#allocation4], 128
    $region49: #{mlp_forward.1} parent=1 // pred_fallthru
      _
    %311 = vsyncpa [#allocation3], 1
    %312 = vsyncpa [#allocation6], 1
    %313 = vsyncpa [#allocation4], 1

</llo_original>
